<compile_context>
chip_gen: v5e
topology: v5e:2x2
jax: 0.10.0
libtpu: 0.0.40
codegen_flags: <defaults>
</compile_context>

<pallas_src>
import functools

import jax
import jax.numpy as jnp
from jax.experimental import pallas as pl
from jax.experimental.pallas import tpu as pltpu

LAYER_1 = 16
LAYER_2 = 16
LAYER_3 = 16
LAYER_4 = 8
EPS = 1e-5  # nn.InstanceNorm1d default


def _round_up(v, m):
    return ((v + m - 1) // m) * m


def _pick_act_dtype():
    # bf16 element-wise / tanh only where the VPU/EUP natively supports bf16
    # (v6e, v7x); keep f32 element-wise math on v5e and older.
    try:
        kind = jax.devices()[0].device_kind.lower()
    except Exception:
        return jnp.float32
    if ("v6" in kind) or ("v7" in kind) or ("7x" in kind):
        return jnp.bfloat16
    return jnp.float32


_ACT_DTYPE = _pick_act_dtype()


def _mlp_kernel(idx_ref, x_ref,
                w1_ref, b1_ref, w2_ref, b2_ref, w3_ref, b3_ref,
                w4_ref, b4_ref, w5_ref, b5_ref,
                o_ref, *, act_dtype):
    # The scalar-prefetch ref is consumed only by the weight index_maps.
    del idx_ref

    x = x_ref[...].astype(jnp.float32)                        # (TN, D) f32

    # InstanceNorm1d over the feature (lane) axis, fused single-pass stats:
    # biased variance, no affine.  var = E[x^2] - mean^2, clamped at 0.
    mean = jnp.mean(x, axis=-1, keepdims=True)
    ex2 = jnp.mean(x * x, axis=-1, keepdims=True)
    var = jnp.maximum(ex2 - mean * mean, 0.0)
    h = (x - mean) * jax.lax.rsqrt(var + EPS)

    def hidden(a, w_ref, b_ref):
        # bf16 MXU operands (weights pre-cast on host), f32 accumulation;
        # bias add + tanh in act_dtype (bf16 on v6e/v7x, f32 on v5e).
        z = jnp.dot(a.astype(jnp.bfloat16), w_ref[...],
                    preferred_element_type=jnp.float32)
        z = z.astype(act_dtype) + b_ref[...].astype(act_dtype)
        return jnp.tanh(z)

    h = hidden(h, w1_ref, b1_ref)
    h = hidden(h, w2_ref, b2_ref)
    h = hidden(h, w3_ref, b3_ref)
    h = hidden(h, w4_ref, b4_ref)

    out = jnp.dot(h.astype(jnp.bfloat16), w5_ref[...],
                  preferred_element_type=jnp.float32)
    out = out + b5_ref[...].astype(jnp.float32)               # (TN, OUT) f32
    o_ref[...] = out.astype(o_ref.dtype)


def init_params(key, input_size, output_size, wc_no):
    """PyTorch-style Linear init.  All wc_no networks are identical copies
    (matching copy.deepcopy of one freshly-initialized MLP).  Weights and
    biases are pre-cast to bf16 on the host (halves weight DMA, removes the
    per-tile in-kernel cast)."""
    dims = [(input_size, LAYER_1), (LAYER_1, LAYER_2), (LAYER_2, LAYER_3),
            (LAYER_3, LAYER_4), (LAYER_4, output_size)]
    params = []
    for (fan_in, fan_out) in dims:
        key, kw = jax.random.split(key)
        bound = 1.0 / float(fan_in) ** 0.5
        w = jax.random.uniform(kw, (fan_in, fan_out), jnp.float32,
                               minval=-bound, maxval=bound)
        key, kb = jax.random.split(key)
        b = jax.random.uniform(kb, (1, fan_out), jnp.float32,
                               minval=-bound, maxval=bound)
        # Stacked along a leading wc axis: (wc_no, fan_in, fan_out).
        params.append((jnp.broadcast_to(w.astype(jnp.bfloat16),
                                        (wc_no, fan_in, fan_out)),
                       jnp.broadcast_to(b.astype(jnp.bfloat16),
                                        (wc_no, 1, fan_out))))
    return params


def _choose_tile(n, d_flat, out_w):
    """Batch-tile rows per grid step, bounded by a VMEM working-set budget
    that is safe on every generation (v7x has the smallest VMEM)."""
    hidden = LAYER_1 + LAYER_2 + LAYER_3 + LAYER_4
    row_bytes = (2 * 2 * d_flat                 # double-buffered bf16 input tile
                 + 2 * 4 * out_w                # double-buffered f32 output tile
                 + 4 * (3 * d_flat + 2 * hidden + out_w))  # f32 temporaries
    budget = 12 * 2**20
    tn_cap = max(32, (budget // row_bytes) // 32 * 32)
    tn = min(8192, tn_cap, _round_up(n, 32))
    if n >= 64:
        # >= 2 grid steps so ("parallel",) can split across both v7x TensorCores.
        tn = min(tn, _round_up(pl.cdiv(n, 2), 32))
    return tn


@jax.jit
def forward(x, params, wc_idx):
    """x: (N, 1, D) float32 (NCL, like the PyTorch module).  Returns (N, output_size)."""
    n, c, d = x.shape
    d_flat = c * d                              # module semantics require C == 1
    (w1, b1), (w2, b2), (w3, b3), (w4, b4), (w5, b5) = params
    wc_no = w1.shape[0]
    output_size = w5.shape[-1]

    # bf16 at the HBM boundary; the kernel upcasts to f32 for the norm stats.
    x2 = x.reshape(n, d_flat).astype(jnp.bfloat16)

    # Clamp wc_idx: an out-of-range block index would drive an OOB weight DMA.
    idx = jnp.clip(jnp.asarray(wc_idx, jnp.int32), 0, wc_no - 1).reshape((1,))

    tn = _choose_tile(n, d_flat, output_size)
    num_tiles = pl.cdiv(n, tn)                  # ragged last tile: masked writes

    def wspec(arr):
        fi, fo = arr.shape[1], arr.shape[2]
        # Leading (wc) dim squeezed; block index chosen by the prefetched wc_idx.
        return pl.BlockSpec((None, fi, fo), lambda i, sidx: (sidx[0], 0, 0))

    grid_spec = pltpu.PrefetchScalarGridSpec(
        num_scalar_prefetch=1,
        grid=(num_tiles,),
        in_specs=[pl.BlockSpec((tn, d_flat), lambda i, sidx: (i, 0)),
                  wspec(w1), wspec(b1), wspec(w2), wspec(b2),
                  wspec(w3), wspec(b3), wspec(w4), wspec(b4),
                  wspec(w5), wspec(b5)],
        out_specs=pl.BlockSpec((tn, output_size), lambda i, sidx: (i, 0)),
    )

    weight_bytes = sum(int(a.size // wc_no) * a.dtype.itemsize
                       for pair in params for a in pair)
    hidden = LAYER_1 + LAYER_2 + LAYER_3 + LAYER_4
    matmul_flops = (d_flat * LAYER_1 + LAYER_1 * LAYER_2 + LAYER_2 * LAYER_3
                    + LAYER_3 * LAYER_4 + LAYER_4 * output_size)
    cost = pl.CostEstimate(
        flops=int(2 * n * matmul_flops + 8 * n * d_flat),
        transcendentals=int(n * (hidden + 1)),
        bytes_accessed=int(2 * n * d_flat + 4 * n * output_size + weight_bytes),
    )

    in_tile = 2 * tn * d_flat * 2               # double-buffered bf16 input
    out_tile = 2 * tn * output_size * 4         # double-buffered f32 output
    scratch = tn * 4 * (3 * d_flat + 2 * hidden + output_size)
    vmem_limit = int(min(32 * 2**20,
                         max(16 * 2**20,
                             2 * (in_tile + out_tile + scratch) + weight_bytes)))

    kernel = functools.partial(_mlp_kernel, act_dtype=_ACT_DTYPE)
    out = pl.pallas_call(
        kernel,
        out_shape=jax.ShapeDtypeStruct((n, output_size), jnp.float32),
        grid_spec=grid_spec,
        compiler_params=pltpu.CompilerParams(
            dimension_semantics=("parallel",),   # megacore split of the batch on v7x
            vmem_limit_bytes=vmem_limit),
        cost_estimate=cost,
    )(idx, x2, w1, b1, w2, b2, w3, b3, w4, b4, w5, b5)
    return out


def _reference(x, params, wc_idx):
    """Pure-JAX f32 reference (module semantics) for a sanity check."""
    n, c, d = x.shape
    xf = x.astype(jnp.float32)
    mean = jnp.mean(xf, axis=-1, keepdims=True)
    var = jnp.mean((xf - mean) ** 2, axis=-1, keepdims=True)
    h = ((xf - mean) / jnp.sqrt(var + EPS)).reshape(n, c * d)
    ws = [(w[wc_idx].astype(jnp.float32), b[wc_idx].astype(jnp.float32))
          for (w, b) in params]
    for (w, b) in ws[:-1]:
        h = jnp.tanh(h @ w + b)
    w, b = ws[-1]
    return h @ w + b


if __name__ == "__main__":
    input_size = 32
    output_size = 4
    wc_no = 3
    batch = 2
    wc_idx = 1

    key = jax.random.PRNGKey(0)
    key, kx = jax.random.split(key)
    x = jax.random.normal(kx, (batch, 1, input_size), jnp.float32)

    params = init_params(key, input_size, output_size, wc_no)

    out = jax.block_until_ready(forward(x, params, wc_idx))
    ref = _reference(x, params, wc_idx)

    assert out.shape == (batch, output_size)
    assert bool(jnp.all(jnp.isfinite(out)))
    # bf16 input / weights / MXU inside the kernel -> loose tolerance vs f32 ref.
    assert jnp.allclose(out, ref, atol=5e-2, rtol=5e-2), "mismatch vs reference"

    # TODO(synk): training machinery (per-network SGD optimizer_dict, smooth_l1
    # loss) lives outside forward() and is not implemented here.
    print("KERNEL_OK")
</pallas_src>

<mosaic_0001>
module attributes {stable_mosaic.version = 11 : i64} {
  func.func @_mlp_kernel(%arg0: i32, %arg1: memref<1xi32, #tpu.memory_space<smem>>, %arg2: memref<32x32xbf16, #tpu.memory_space<vmem>>, %arg3: memref<1x32x16xbf16, #tpu.memory_space<vmem>>, %arg4: memref<1x1x16xbf16, #tpu.memory_space<vmem>>, %arg5: memref<1x16x16xbf16, #tpu.memory_space<vmem>>, %arg6: memref<1x1x16xbf16, #tpu.memory_space<vmem>>, %arg7: memref<1x16x16xbf16, #tpu.memory_space<vmem>>, %arg8: memref<1x1x16xbf16, #tpu.memory_space<vmem>>, %arg9: memref<1x16x8xbf16, #tpu.memory_space<vmem>>, %arg10: memref<1x1x8xbf16, #tpu.memory_space<vmem>>, %arg11: memref<1x8x4xbf16, #tpu.memory_space<vmem>>, %arg12: memref<1x1x4xbf16, #tpu.memory_space<vmem>>, %arg13: memref<32x4xf32, #tpu.memory_space<vmem>>) attributes {dimension_semantics = [#tpu.dimension_semantics<parallel>], iteration_bounds = array<i64: 1>, scalar_prefetch = 1 : i64, scratch_operands = 0 : i64, tpu.core_type = #tpu.core_type<tc>, window_params = [{transform_indices = @transform_0, window_bounds = array<i64: 32, 32>}, {transform_indices = @transform_1, window_bounds = array<i64: 1, 32, 16>}, {transform_indices = @transform_2, window_bounds = array<i64: 1, 1, 16>}, {transform_indices = @transform_3, window_bounds = array<i64: 1, 16, 16>}, {transform_indices = @transform_4, window_bounds = array<i64: 1, 1, 16>}, {transform_indices = @transform_5, window_bounds = array<i64: 1, 16, 16>}, {transform_indices = @transform_6, window_bounds = array<i64: 1, 1, 16>}, {transform_indices = @transform_7, window_bounds = array<i64: 1, 16, 8>}, {transform_indices = @transform_8, window_bounds = array<i64: 1, 1, 8>}, {transform_indices = @transform_9, window_bounds = array<i64: 1, 8, 4>}, {transform_indices = @transform_10, window_bounds = array<i64: 1, 1, 4>}, {transform_indices = @transform_11, window_bounds = array<i64: 32, 4>}]} {
    %c0 = arith.constant 0 : index
    %c0_0 = arith.constant 0 : index
    %0 = vector.load %arg2[%c0, %c0_0] : memref<32x32xbf16, #tpu.memory_space<vmem>>, vector<32x32xbf16>
    %1 = arith.extf %0 : vector<32x32xbf16> to vector<32x32xf32>
    %cst = arith.constant dense<0.000000e+00> : vector<32xf32>
    %2 = vector.multi_reduction <add>, %1, %cst [1] : vector<32x32xf32> to vector<32xf32>
    %3 = vector.shape_cast %2 : vector<32xf32> to vector<32x1xf32>
    %cst_1 = arith.constant 3.200000e+01 : f32
    %4 = vector.broadcast %cst_1 : f32 to vector<32x1xf32>
    %5 = arith.divf %3, %4 : vector<32x1xf32>
    %6 = arith.mulf %1, %1 : vector<32x32xf32>
    %cst_2 = arith.constant dense<0.000000e+00> : vector<32xf32>
    %7 = vector.multi_reduction <add>, %6, %cst_2 [1] : vector<32x32xf32> to vector<32xf32>
    %8 = vector.shape_cast %7 : vector<32xf32> to vector<32x1xf32>
    %cst_3 = arith.constant 3.200000e+01 : f32
    %9 = vector.broadcast %cst_3 : f32 to vector<32x1xf32>
    %10 = arith.divf %8, %9 : vector<32x1xf32>
    %11 = arith.mulf %5, %5 : vector<32x1xf32>
    %12 = arith.subf %10, %11 : vector<32x1xf32>
    %cst_4 = arith.constant 0.000000e+00 : f32
    %13 = vector.broadcast %cst_4 : f32 to vector<32x1xf32>
    %14 = arith.maximumf %12, %13 : vector<32x1xf32>
    %15 = vector.broadcast %5 : vector<32x1xf32> to vector<32x32xf32>
    %16 = arith.subf %1, %15 : vector<32x32xf32>
    %cst_5 = arith.constant 9.99999974E-6 : f32
    %17 = vector.broadcast %cst_5 : f32 to vector<32x1xf32>
    %18 = arith.addf %14, %17 : vector<32x1xf32>
    %19 = math.rsqrt %18 : vector<32x1xf32>
    %20 = vector.broadcast %19 : vector<32x1xf32> to vector<32x32xf32>
    %21 = arith.mulf %16, %20 : vector<32x32xf32>
    %22 = arith.truncf %21 : vector<32x32xf32> to vector<32x32xbf16>
    %c0_6 = arith.constant 0 : index
    %c0_7 = arith.constant 0 : index
    %c0_8 = arith.constant 0 : index
    %23 = vector.load %arg3[%c0_6, %c0_7, %c0_8] : memref<1x32x16xbf16, #tpu.memory_space<vmem>>, vector<1x32x16xbf16>
    %24 = vector.shape_cast %23 : vector<1x32x16xbf16> to vector<32x16xbf16>
    %cst_9 = arith.constant dense<0.000000e+00> : vector<32x16xf32>
    %25 = tpu.matmul %22, %24, %cst_9 {dimension_numbers = #tpu.dot_dimension_numbers<[1], [0], [0], [1], [0, 0, 1, 1], [], []>} : vector<32x32xbf16>, vector<32x16xbf16>, vector<32x16xf32> -> vector<32x16xf32>
    %c0_10 = arith.constant 0 : index
    %c0_11 = arith.constant 0 : index
    %c0_12 = arith.constant 0 : index
    %26 = vector.load %arg4[%c0_10, %c0_11, %c0_12] : memref<1x1x16xbf16, #tpu.memory_space<vmem>>, vector<1x1x16xbf16>
    %27 = vector.shape_cast %26 : vector<1x1x16xbf16> to vector<1x16xbf16>
    %28 = arith.extf %27 : vector<1x16xbf16> to vector<1x16xf32>
    %29 = vector.broadcast %28 : vector<1x16xf32> to vector<32x16xf32>
    %30 = arith.addf %25, %29 : vector<32x16xf32>
    %31 = math.tanh %30 : vector<32x16xf32>
    %32 = arith.truncf %31 : vector<32x16xf32> to vector<32x16xbf16>
    %c0_13 = arith.constant 0 : index
    %c0_14 = arith.constant 0 : index
    %c0_15 = arith.constant 0 : index
    %33 = vector.load %arg5[%c0_13, %c0_14, %c0_15] : memref<1x16x16xbf16, #tpu.memory_space<vmem>>, vector<1x16x16xbf16>
    %34 = vector.shape_cast %33 : vector<1x16x16xbf16> to vector<16x16xbf16>
    %cst_16 = arith.constant dense<0.000000e+00> : vector<32x16xf32>
    %35 = tpu.matmul %32, %34, %cst_16 {dimension_numbers = #tpu.dot_dimension_numbers<[1], [0], [0], [1], [0, 0, 1, 1], [], []>} : vector<32x16xbf16>, vector<16x16xbf16>, vector<32x16xf32> -> vector<32x16xf32>
    %c0_17 = arith.constant 0 : index
    %c0_18 = arith.constant 0 : index
    %c0_19 = arith.constant 0 : index
    %36 = vector.load %arg6[%c0_17, %c0_18, %c0_19] : memref<1x1x16xbf16, #tpu.memory_space<vmem>>, vector<1x1x16xbf16>
    %37 = vector.shape_cast %36 : vector<1x1x16xbf16> to vector<1x16xbf16>
    %38 = arith.extf %37 : vector<1x16xbf16> to vector<1x16xf32>
    %39 = vector.broadcast %38 : vector<1x16xf32> to vector<32x16xf32>
    %40 = arith.addf %35, %39 : vector<32x16xf32>
    %41 = math.tanh %40 : vector<32x16xf32>
    %42 = arith.truncf %41 : vector<32x16xf32> to vector<32x16xbf16>
    %c0_20 = arith.constant 0 : index
    %c0_21 = arith.constant 0 : index
    %c0_22 = arith.constant 0 : index
    %43 = vector.load %arg7[%c0_20, %c0_21, %c0_22] : memref<1x16x16xbf16, #tpu.memory_space<vmem>>, vector<1x16x16xbf16>
    %44 = vector.shape_cast %43 : vector<1x16x16xbf16> to vector<16x16xbf16>
    %cst_23 = arith.constant dense<0.000000e+00> : vector<32x16xf32>
    %45 = tpu.matmul %42, %44, %cst_23 {dimension_numbers = #tpu.dot_dimension_numbers<[1], [0], [0], [1], [0, 0, 1, 1], [], []>} : vector<32x16xbf16>, vector<16x16xbf16>, vector<32x16xf32> -> vector<32x16xf32>
    %c0_24 = arith.constant 0 : index
    %c0_25 = arith.constant 0 : index
    %c0_26 = arith.constant 0 : index
    %46 = vector.load %arg8[%c0_24, %c0_25, %c0_26] : memref<1x1x16xbf16, #tpu.memory_space<vmem>>, vector<1x1x16xbf16>
    %47 = vector.shape_cast %46 : vector<1x1x16xbf16> to vector<1x16xbf16>
    %48 = arith.extf %47 : vector<1x16xbf16> to vector<1x16xf32>
    %49 = vector.broadcast %48 : vector<1x16xf32> to vector<32x16xf32>
    %50 = arith.addf %45, %49 : vector<32x16xf32>
    %51 = math.tanh %50 : vector<32x16xf32>
    %52 = arith.truncf %51 : vector<32x16xf32> to vector<32x16xbf16>
    %c0_27 = arith.constant 0 : index
    %c0_28 = arith.constant 0 : index
    %c0_29 = arith.constant 0 : index
    %53 = vector.load %arg9[%c0_27, %c0_28, %c0_29] : memref<1x16x8xbf16, #tpu.memory_space<vmem>>, vector<1x16x8xbf16>
    %54 = vector.shape_cast %53 : vector<1x16x8xbf16> to vector<16x8xbf16>
    %cst_30 = arith.constant dense<0.000000e+00> : vector<32x8xf32>
    %55 = tpu.matmul %52, %54, %cst_30 {dimension_numbers = #tpu.dot_dimension_numbers<[1], [0], [0], [1], [0, 0, 1, 1], [], []>} : vector<32x16xbf16>, vector<16x8xbf16>, vector<32x8xf32> -> vector<32x8xf32>
    %c0_31 = arith.constant 0 : index
    %c0_32 = arith.constant 0 : index
    %c0_33 = arith.constant 0 : index
    %56 = vector.load %arg10[%c0_31, %c0_32, %c0_33] : memref<1x1x8xbf16, #tpu.memory_space<vmem>>, vector<1x1x8xbf16>
    %57 = vector.shape_cast %56 : vector<1x1x8xbf16> to vector<1x8xbf16>
    %58 = arith.extf %57 : vector<1x8xbf16> to vector<1x8xf32>
    %59 = vector.broadcast %58 : vector<1x8xf32> to vector<32x8xf32>
    %60 = arith.addf %55, %59 : vector<32x8xf32>
    %61 = math.tanh %60 : vector<32x8xf32>
    %62 = arith.truncf %61 : vector<32x8xf32> to vector<32x8xbf16>
    %c0_34 = arith.constant 0 : index
    %c0_35 = arith.constant 0 : index
    %c0_36 = arith.constant 0 : index
    %63 = vector.load %arg11[%c0_34, %c0_35, %c0_36] : memref<1x8x4xbf16, #tpu.memory_space<vmem>>, vector<1x8x4xbf16>
    %64 = vector.shape_cast %63 : vector<1x8x4xbf16> to vector<8x4xbf16>
    %cst_37 = arith.constant dense<0.000000e+00> : vector<32x4xf32>
    %65 = tpu.matmul %62, %64, %cst_37 {dimension_numbers = #tpu.dot_dimension_numbers<[1], [0], [0], [1], [0, 0, 1, 1], [], []>} : vector<32x8xbf16>, vector<8x4xbf16>, vector<32x4xf32> -> vector<32x4xf32>
    %c0_38 = arith.constant 0 : index
    %c0_39 = arith.constant 0 : index
    %c0_40 = arith.constant 0 : index
    %66 = vector.load %arg12[%c0_38, %c0_39, %c0_40] : memref<1x1x4xbf16, #tpu.memory_space<vmem>>, vector<1x1x4xbf16>
    %67 = vector.shape_cast %66 : vector<1x1x4xbf16> to vector<1x4xbf16>
    %68 = arith.extf %67 : vector<1x4xbf16> to vector<1x4xf32>
    %69 = vector.broadcast %68 : vector<1x4xf32> to vector<32x4xf32>
    %70 = arith.addf %65, %69 : vector<32x4xf32>
    %c0_41 = arith.constant 0 : index
    %c0_42 = arith.constant 0 : index
    %71 = vector.load %arg13[%c0_41, %c0_42] : memref<32x4xf32, #tpu.memory_space<vmem>>, vector<32x4xf32>
    tpu.vector_store %arg13[%c0_41, %c0_42], %70 {strides = array<i32>} : memref<32x4xf32, #tpu.memory_space<vmem>>, vector<32x4xf32>,
    return
  }
  func.func @transform_0(%arg0: i32, %arg1: memref<1xi32, #tpu.memory_space<smem>>) -> (i32, i32) {
    %c0_i32 = arith.constant 0 : i32
    %c0_i32_0 = arith.constant 0 : i32
    return %arg0, %c0_i32 : i32, i32
  }
  func.func @transform_1(%arg0: i32, %arg1: memref<1xi32, #tpu.memory_space<smem>>) -> (i32, i32, i32) {
    %c0 = arith.constant 0 : index
    %0 = memref.load %arg1[%c0] : memref<1xi32, #tpu.memory_space<smem>>
    %c0_i32 = arith.constant 0 : i32
    %c0_i32_0 = arith.constant 0 : i32
    %c0_i32_1 = arith.constant 0 : i32
    return %0, %c0_i32, %c0_i32_0 : i32, i32, i32
  }
  func.func @transform_2(%arg0: i32, %arg1: memref<1xi32, #tpu.memory_space<smem>>) -> (i32, i32, i32) {
    %c0 = arith.constant 0 : index
    %0 = memref.load %arg1[%c0] : memref<1xi32, #tpu.memory_space<smem>>
    %c0_i32 = arith.constant 0 : i32
    %c0_i32_0 = arith.constant 0 : i32
    %c0_i32_1 = arith.constant 0 : i32
    return %0, %c0_i32, %c0_i32_0 : i32, i32, i32
  }
  func.func @transform_3(%arg0: i32, %arg1: memref<1xi32, #tpu.memory_space<smem>>) -> (i32, i32, i32) {
    %c0 = arith.constant 0 : index
    %0 = memref.load %arg1[%c0] : memref<1xi32, #tpu.memory_space<smem>>
    %c0_i32 = arith.constant 0 : i32
    %c0_i32_0 = arith.constant 0 : i32
    %c0_i32_1 = arith.constant 0 : i32
    return %0, %c0_i32, %c0_i32_0 : i32, i32, i32
  }
  func.func @transform_4(%arg0: i32, %arg1: memref<1xi32, #tpu.memory_space<smem>>) -> (i32, i32, i32) {
    %c0 = arith.constant 0 : index
    %0 = memref.load %arg1[%c0] : memref<1xi32, #tpu.memory_space<smem>>
    %c0_i32 = arith.constant 0 : i32
    %c0_i32_0 = arith.constant 0 : i32
    %c0_i32_1 = arith.constant 0 : i32
    return %0, %c0_i32, %c0_i32_0 : i32, i32, i32
  }
  func.func @transform_5(%arg0: i32, %arg1: memref<1xi32, #tpu.memory_space<smem>>) -> (i32, i32, i32) {
    %c0 = arith.constant 0 : index
    %0 = memref.load %arg1[%c0] : memref<1xi32, #tpu.memory_space<smem>>
    %c0_i32 = arith.constant 0 : i32
    %c0_i32_0 = arith.constant 0 : i32
    %c0_i32_1 = arith.constant 0 : i32
    return %0, %c0_i32, %c0_i32_0 : i32, i32, i32
  }
  func.func @transform_6(%arg0: i32, %arg1: memref<1xi32, #tpu.memory_space<smem>>) -> (i32, i32, i32) {
    %c0 = arith.constant 0 : index
    %0 = memref.load %arg1[%c0] : memref<1xi32, #tpu.memory_space<smem>>
    %c0_i32 = arith.constant 0 : i32
    %c0_i32_0 = arith.constant 0 : i32
    %c0_i32_1 = arith.constant 0 : i32
    return %0, %c0_i32, %c0_i32_0 : i32, i32, i32
  }
  func.func @transform_7(%arg0: i32, %arg1: memref<1xi32, #tpu.memory_space<smem>>) -> (i32, i32, i32) {
    %c0 = arith.constant 0 : index
    %0 = memref.load %arg1[%c0] : memref<1xi32, #tpu.memory_space<smem>>
    %c0_i32 = arith.constant 0 : i32
    %c0_i32_0 = arith.constant 0 : i32
    %c0_i32_1 = arith.constant 0 : i32
    return %0, %c0_i32, %c0_i32_0 : i32, i32, i32
  }
  func.func @transform_8(%arg0: i32, %arg1: memref<1xi32, #tpu.memory_space<smem>>) -> (i32, i32, i32) {
    %c0 = arith.constant 0 : index
    %0 = memref.load %arg1[%c0] : memref<1xi32, #tpu.memory_space<smem>>
    %c0_i32 = arith.constant 0 : i32
    %c0_i32_0 = arith.constant 0 : i32
    %c0_i32_1 = arith.constant 0 : i32
    return %0, %c0_i32, %c0_i32_0 : i32, i32, i32
  }
  func.func @transform_9(%arg0: i32, %arg1: memref<1xi32, #tpu.memory_space<smem>>) -> (i32, i32, i32) {
    %c0 = arith.constant 0 : index
    %0 = memref.load %arg1[%c0] : memref<1xi32, #tpu.memory_space<smem>>
    %c0_i32 = arith.constant 0 : i32
    %c0_i32_0 = arith.constant 0 : i32
    %c0_i32_1 = arith.constant 0 : i32
    return %0, %c0_i32, %c0_i32_0 : i32, i32, i32
  }
  func.func @transform_10(%arg0: i32, %arg1: memref<1xi32, #tpu.memory_space<smem>>) -> (i32, i32, i32) {
    %c0 = arith.constant 0 : index
    %0 = memref.load %arg1[%c0] : memref<1xi32, #tpu.memory_space<smem>>
    %c0_i32 = arith.constant 0 : i32
    %c0_i32_0 = arith.constant 0 : i32
    %c0_i32_1 = arith.constant 0 : i32
    return %0, %c0_i32, %c0_i32_0 : i32, i32, i32
  }
  func.func @transform_11(%arg0: i32, %arg1: memref<1xi32, #tpu.memory_space<smem>>) -> (i32, i32) {
    %c0_i32 = arith.constant 0 : i32
    %c0_i32_0 = arith.constant 0 : i32
    return %arg0, %c0_i32 : i32, i32
  }
}

</mosaic_0001>

<llo_original>
// kernel: forward.1
$region0: #{forward.1}
  #allocation0 [shape = 'u32[]', space=smem, size = 0x4, offset = 0x4, fixed_abs, tag = 'smem constant byte address 0x4 - core index']
  #allocation1 [shape = 'u32[72,128]{1,0:T(1,128)}', space=vmem, size = 0x9000, scoped, tag = 'internal scratch']
  #allocation2 [shape = 's32[1]{0}', space=sflag, size = 0x4, scoped, tag = 'scoped memory for forward.1']
  #allocation3 [shape = 's32[1]{0:T(128)S(6)}', space=smem, size = 0x200, scoped, tag = 'prefetched SMEM operand 0']
  %s0 = inlined_call_operand.<no memory space> [shape: s32[1], index: 0, kind: input, shape index: {}]
  %s1 = inlined_call_operand.vmem [shape: bf16[2,32], index: 1, kind: input, shape index: {}]
  %s2 = inlined_call_operand.vmem [shape: bf16[3,32,16], index: 2, kind: input, shape index: {}]
  %s3 = inlined_call_operand.vmem [shape: bf16[3,1,16], index: 3, kind: input, shape index: {}]
  %s4 = inlined_call_operand.vmem [shape: bf16[3,16,16], index: 4, kind: input, shape index: {}]
  %s5 = inlined_call_operand.vmem [shape: bf16[3,1,16], index: 5, kind: input, shape index: {}]
  %s6 = inlined_call_operand.vmem [shape: bf16[3,16,16], index: 6, kind: input, shape index: {}]
  %s7 = inlined_call_operand.vmem [shape: bf16[3,1,16], index: 7, kind: input, shape index: {}]
  %s8 = inlined_call_operand.vmem [shape: bf16[3,16,8], index: 8, kind: input, shape index: {}]
  %s9 = inlined_call_operand.vmem [shape: bf16[3,1,8], index: 9, kind: input, shape index: {}]
  %s10 = inlined_call_operand.vmem [shape: bf16[3,8,4], index: 10, kind: input, shape index: {}]
  %s11 = inlined_call_operand.vmem [shape: bf16[3,1,4], index: 11, kind: input, shape index: {}]
  %s12 = inlined_call_operand.hbm [shape: f32[2,4], index: 12, kind: output, shape index: {}]
  %s13 = sld [smem:[#allocation0]]
  $region54: #{forward.1} parent=0
    _
  %s15 = ssub.s32 1, %s13
  %s16 = scalar_select 0, %s15, %s13
  %17 = sst [smem:[#allocation3]] %s0
  $region1: #{forward.1} parent=0
    #allocation4 [shape = 'u8[16384]{0}', space=vmem, size = 0x4000, scoped, tag = 'output window, operand 0, single buffered']
    #allocation5 [shape = 's32[1]{0}', space=sflag, size = 0x4, scoped, tag = 'scoped memory for forward.1']
    %18 = vsyncpa [#allocation5], 0
    // Predicated region
    $region2: #{forward.1} parent=1 // pred_check
      _
    $region3: #{forward.1} parent=1 // pred_check_branch
      %20 = sbr.rel (0) target = $region5
    $region4: #{forward.1} parent=1 // pred_region
      _
    $region5: #{forward.1} parent=1 // pred_fallthru
      _
    // Predicated region
    $region6: #{forward.1} parent=1 // pred_check
      _
    $region7: #{forward.1} parent=1 // pred_check_branch
      %22 = sbr.rel (0) target = $region9
    $region8: #{forward.1} parent=1 // pred_region
      %s23 = sld [smem:[#allocation3]]
      %p24 = scmp.lt.s32.totalorder %s23, 2
      %s25 = scalar_select %p24, %s23, 2
      %s26 = smul.addr %s25, 4
      %s27 = smul.addr %s26, 4
      %s28 = scalar_lea.vmem %s2, %s27
      %s29 = sld [smem:[#allocation3]]
    $region9: #{forward.1} parent=1 // pred_fallthru
      _
    // Predicated region
    $region10: #{forward.1} parent=1 // pred_check
      _
    $region11: #{forward.1} parent=1 // pred_check_branch
      %31 = sbr.rel (0) target = $region13
    $region12: #{forward.1} parent=1 // pred_region
      %s32 = sld [smem:[#allocation3]]
      %p33 = scmp.lt.s32.totalorder %s32, 2
      %s34 = scalar_select %p33, %s32, 2
      %s35 = scalar_lea.vmem %s3, %s34
      %s36 = sld [smem:[#allocation3]]
    $region13: #{forward.1} parent=1 // pred_fallthru
      _
    // Predicated region
    $region14: #{forward.1} parent=1 // pred_check
      _
    $region15: #{forward.1} parent=1 // pred_check_branch
      %38 = sbr.rel (0) target = $region17
    $region16: #{forward.1} parent=1 // pred_region
      %s39 = sld [smem:[#allocation3]]
      %p40 = scmp.lt.s32.totalorder %s39, 2
      %s41 = scalar_select %p40, %s39, 2
      %s42 = smul.addr %s41, 2
      %s43 = smul.addr %s42, 4
      %s44 = scalar_lea.vmem %s4, %s43
      %s45 = sld [smem:[#allocation3]]
    $region17: #{forward.1} parent=1 // pred_fallthru
      _
    // Predicated region
    $region18: #{forward.1} parent=1 // pred_check
      _
    $region19: #{forward.1} parent=1 // pred_check_branch
      %47 = sbr.rel (0) target = $region21
    $region20: #{forward.1} parent=1 // pred_region
      %s48 = sld [smem:[#allocation3]]
      %p49 = scmp.lt.s32.totalorder %s48, 2
      %s50 = scalar_select %p49, %s48, 2
      %s51 = scalar_lea.vmem %s5, %s50
      %s52 = sld [smem:[#allocation3]]
    $region21: #{forward.1} parent=1 // pred_fallthru
      _
    // Predicated region
    $region22: #{forward.1} parent=1 // pred_check
      _
    $region23: #{forward.1} parent=1 // pred_check_branch
      %54 = sbr.rel (0) target = $region25
    $region24: #{forward.1} parent=1 // pred_region
      %s55 = sld [smem:[#allocation3]]
      %p56 = scmp.lt.s32.totalorder %s55, 2
      %s57 = scalar_select %p56, %s55, 2
      %s58 = smul.addr %s57, 2
      %s59 = smul.addr %s58, 4
      %s60 = scalar_lea.vmem %s6, %s59
      %s61 = sld [smem:[#allocation3]]
    $region25: #{forward.1} parent=1 // pred_fallthru
      _
    // Predicated region
    $region26: #{forward.1} parent=1 // pred_check
      _
    $region27: #{forward.1} parent=1 // pred_check_branch
      %63 = sbr.rel (0) target = $region29
    $region28: #{forward.1} parent=1 // pred_region
      %s64 = sld [smem:[#allocation3]]
      %p65 = scmp.lt.s32.totalorder %s64, 2
      %s66 = scalar_select %p65, %s64, 2
      %s67 = scalar_lea.vmem %s7, %s66
      %s68 = sld [smem:[#allocation3]]
    $region29: #{forward.1} parent=1 // pred_fallthru
      _
    // Predicated region
    $region30: #{forward.1} parent=1 // pred_check
      _
    $region31: #{forward.1} parent=1 // pred_check_branch
      %70 = sbr.rel (0) target = $region33
    $region32: #{forward.1} parent=1 // pred_region
      %s71 = sld [smem:[#allocation3]]
      %p72 = scmp.lt.s32.totalorder %s71, 2
      %s73 = scalar_select %p72, %s71, 2
      %s74 = smul.addr %s73, 2
      %s75 = smul.addr %s74, 4
      %s76 = scalar_lea.vmem %s8, %s75
      %s77 = sld [smem:[#allocation3]]
    $region33: #{forward.1} parent=1 // pred_fallthru
      _
    // Predicated region
    $region34: #{forward.1} parent=1 // pred_check
      _
    $region35: #{forward.1} parent=1 // pred_check_branch
      %79 = sbr.rel (0) target = $region37
    $region36: #{forward.1} parent=1 // pred_region
      %s80 = sld [smem:[#allocation3]]
      %p81 = scmp.lt.s32.totalorder %s80, 2
      %s82 = scalar_select %p81, %s80, 2
      %s83 = scalar_lea.vmem %s9, %s82
      %s84 = sld [smem:[#allocation3]]
    $region37: #{forward.1} parent=1 // pred_fallthru
      _
    // Predicated region
    $region38: #{forward.1} parent=1 // pred_check
      _
    $region39: #{forward.1} parent=1 // pred_check_branch
      %86 = sbr.rel (0) target = $region41
    $region40: #{forward.1} parent=1 // pred_region
      %s87 = sld [smem:[#allocation3]]
      %p88 = scmp.lt.s32.totalorder %s87, 2
      %s89 = scalar_select %p88, %s87, 2
      %s90 = smul.addr %s89, 4
      %s91 = scalar_lea.vmem %s10, %s90
      %s92 = sld [smem:[#allocation3]]
    $region41: #{forward.1} parent=1 // pred_fallthru
      _
    // Predicated region
    $region42: #{forward.1} parent=1 // pred_check
      _
    $region43: #{forward.1} parent=1 // pred_check_branch
      %94 = sbr.rel (0) target = $region45
    $region44: #{forward.1} parent=1 // pred_region
      %s95 = sld [smem:[#allocation3]]
      %p96 = scmp.lt.s32.totalorder %s95, 2
      %s97 = scalar_select %p96, %s95, 2
      %s98 = scalar_lea.vmem %s11, %s97
      %s99 = sld [smem:[#allocation3]]
    $region45: #{forward.1} parent=1 // pred_fallthru
      _
    %s100 = sld [smem:[#allocation3]]
    %p101 = scmp.lt.s32.totalorder %s100, 2
    %s102 = scalar_select %p101, %s100, 2
    %s103 = smul.addr %s102, 4
    %s104 = smul.addr %s103, 4
    %s105 = scalar_lea.vmem %s2, %s104
    %s106 = sld [smem:[#allocation3]]
    %p107 = scmp.lt.s32.totalorder %s106, 2
    %s108 = scalar_select %p107, %s106, 2
    %s109 = scalar_lea.vmem %s3, %s108
    %s110 = sld [smem:[#allocation3]]
    %p111 = scmp.lt.s32.totalorder %s110, 2
    %s112 = scalar_select %p111, %s110, 2
    %s113 = smul.addr %s112, 2
    %s114 = smul.addr %s113, 4
    %s115 = scalar_lea.vmem %s4, %s114
    %s116 = sld [smem:[#allocation3]]
    %p117 = scmp.lt.s32.totalorder %s116, 2
    %s118 = scalar_select %p117, %s116, 2
    %s119 = scalar_lea.vmem %s5, %s118
    %s120 = sld [smem:[#allocation3]]
    %p121 = scmp.lt.s32.totalorder %s120, 2
    %s122 = scalar_select %p121, %s120, 2
    %s123 = smul.addr %s122, 2
    %s124 = smul.addr %s123, 4
    %s125 = scalar_lea.vmem %s6, %s124
    %s126 = sld [smem:[#allocation3]]
    %p127 = scmp.lt.s32.totalorder %s126, 2
    %s128 = scalar_select %p127, %s126, 2
    %s129 = scalar_lea.vmem %s7, %s128
    %s130 = sld [smem:[#allocation3]]
    %p131 = scmp.lt.s32.totalorder %s130, 2
    %s132 = scalar_select %p131, %s130, 2
    %s133 = smul.addr %s132, 2
    %s134 = smul.addr %s133, 4
    %s135 = scalar_lea.vmem %s8, %s134
    %s136 = sld [smem:[#allocation3]]
    %p137 = scmp.lt.s32.totalorder %s136, 2
    %s138 = scalar_select %p137, %s136, 2
    %s139 = scalar_lea.vmem %s9, %s138
    %s140 = sld [smem:[#allocation3]]
    %p141 = scmp.lt.s32.totalorder %s140, 2
    %s142 = scalar_select %p141, %s140, 2
    %s143 = smul.addr %s142, 4
    %s144 = scalar_lea.vmem %s10, %s143
    %s145 = sld [smem:[#allocation3]]
    %p146 = scmp.lt.s32.totalorder %s145, 2
    %s147 = scalar_select %p146, %s145, 2
    %s148 = scalar_lea.vmem %s11, %s147
    %s149 = sld [smem:[#allocation3]]
    %p150 = scmp.lt.s32.totalorder %s149, 2
    %s151 = scalar_select %p150, %s149, 2
    %s152 = smul.addr %s151, 4
    %s153 = smul.addr %s152, 4
    %s154 = scalar_lea.vmem %s2, %s153
    %s155 = sld [smem:[#allocation3]]
    %s156 = sld [smem:[#allocation3]]
    %p157 = scmp.lt.s32.totalorder %s156, 2
    %s158 = scalar_select %p157, %s156, 2
    %s159 = scalar_lea.vmem %s3, %s158
    %s160 = sld [smem:[#allocation3]]
    %s161 = sld [smem:[#allocation3]]
    %p162 = scmp.lt.s32.totalorder %s161, 2
    %s163 = scalar_select %p162, %s161, 2
    %s164 = smul.addr %s163, 2
    %s165 = smul.addr %s164, 4
    %s166 = scalar_lea.vmem %s4, %s165
    %s167 = sld [smem:[#allocation3]]
    %s168 = sld [smem:[#allocation3]]
    %p169 = scmp.lt.s32.totalorder %s168, 2
    %s170 = scalar_select %p169, %s168, 2
    %s171 = scalar_lea.vmem %s5, %s170
    %s172 = sld [smem:[#allocation3]]
    %s173 = sld [smem:[#allocation3]]
    %p174 = scmp.lt.s32.totalorder %s173, 2
    %s175 = scalar_select %p174, %s173, 2
    %s176 = smul.addr %s175, 2
    %s177 = smul.addr %s176, 4
    %s178 = scalar_lea.vmem %s6, %s177
    %s179 = sld [smem:[#allocation3]]
    %s180 = sld [smem:[#allocation3]]
    %p181 = scmp.lt.s32.totalorder %s180, 2
    %s182 = scalar_select %p181, %s180, 2
    %s183 = scalar_lea.vmem %s7, %s182
    %s184 = sld [smem:[#allocation3]]
    %s185 = sld [smem:[#allocation3]]
    %p186 = scmp.lt.s32.totalorder %s185, 2
    %s187 = scalar_select %p186, %s185, 2
    %s188 = smul.addr %s187, 2
    %s189 = smul.addr %s188, 4
    %s190 = scalar_lea.vmem %s8, %s189
    %s191 = sld [smem:[#allocation3]]
    %s192 = sld [smem:[#allocation3]]
    %p193 = scmp.lt.s32.totalorder %s192, 2
    %s194 = scalar_select %p193, %s192, 2
    %s195 = scalar_lea.vmem %s9, %s194
    %s196 = sld [smem:[#allocation3]]
    %s197 = sld [smem:[#allocation3]]
    %p198 = scmp.lt.s32.totalorder %s197, 2
    %s199 = scalar_select %p198, %s197, 2
    %s200 = smul.addr %s199, 4
    %s201 = scalar_lea.vmem %s10, %s200
    %s202 = sld [smem:[#allocation3]]
    %s203 = sld [smem:[#allocation3]]
    %p204 = scmp.lt.s32.totalorder %s203, 2
    %s205 = scalar_select %p204, %s203, 2
    %s206 = scalar_lea.vmem %s11, %s205
    %s207 = sld [smem:[#allocation3]]
    %v209 = vld [vmem:[%s1] sm:$0x1]
    %v210 = vld [vmem:[%s1 + $0x1] sm:$0x1]
    %v211 = vld [vmem:[%s1 + $0x2] sm:$0x1]
    %v212 = vld [vmem:[%s1 + $0x3] sm:$0x1]
    %v213 = vld [vmem:[%s1 + $0x4] sm:$0x1]
    %v214 = vld [vmem:[%s1 + $0x5] sm:$0x1]
    %v215 = vld [vmem:[%s1 + $0x6] sm:$0x1]
    %v216 = vld [vmem:[%s1 + $0x7] sm:$0x1]
    %v217 = vld [vmem:[%s1 + $0x8] sm:$0x1]
    %v218 = vld [vmem:[%s1 + $0x9] sm:$0x1]
    %v219 = vld [vmem:[%s1 + $0xa] sm:$0x1]
    %v220 = vld [vmem:[%s1 + $0xb] sm:$0x1]
    %v221 = vld [vmem:[%s1 + $0xc] sm:$0x1]
    %v222 = vld [vmem:[%s1 + $0xd] sm:$0x1]
    %v223 = vld [vmem:[%s1 + $0xe] sm:$0x1]
    %v224 = vld [vmem:[%s1 + $0xf] sm:$0x1]
    %v225 = vunpack.c.l.bf16 %v209
    %v226 = vunpack.c.l.bf16 %v210
    %v227 = vunpack.c.l.bf16 %v211
    %v228 = vunpack.c.l.bf16 %v212
    %v229 = vunpack.c.l.bf16 %v213
    %v230 = vunpack.c.l.bf16 %v214
    %v231 = vunpack.c.l.bf16 %v215
    %v232 = vunpack.c.l.bf16 %v216
    %v233 = vunpack.c.l.bf16 %v217
    %v234 = vunpack.c.l.bf16 %v218
    %v235 = vunpack.c.l.bf16 %v219
    %v236 = vunpack.c.l.bf16 %v220
    %v237 = vunpack.c.l.bf16 %v221
    %v238 = vunpack.c.l.bf16 %v222
    %v239 = vunpack.c.l.bf16 %v223
    %v240 = vunpack.c.l.bf16 %v224
    %257 = vst [vmem:[#allocation1] ss:$4 sm:$0xff] %v225
    %s258 = scalar_lea.vmem [#allocation1], 1
    %259 = vst [vmem:[%s258] ss:$4 sm:$0xff] %v226
    %s260 = scalar_lea.vmem [#allocation1], 2
    %261 = vst [vmem:[%s260] ss:$4 sm:$0xff] %v227
    %s262 = scalar_lea.vmem [#allocation1], 3
    %263 = vst [vmem:[%s262] ss:$4 sm:$0xff] %v228
    %s264 = scalar_lea.vmem [#allocation1], 32
    %265 = vst [vmem:[%s264] ss:$4 sm:$0xff] %v229
    %s266 = scalar_lea.vmem [#allocation1], 33
    %267 = vst [vmem:[%s266] ss:$4 sm:$0xff] %v230
    %s268 = scalar_lea.vmem [#allocation1], 34
    %269 = vst [vmem:[%s268] ss:$4 sm:$0xff] %v231
    %s270 = scalar_lea.vmem [#allocation1], 35
    %271 = vst [vmem:[%s270] ss:$4 sm:$0xff] %v232
    %v272 = vld.sshfl [vmem:[#allocation1] sm:$0xff pattern:$0x73625140]
    %v273 = vld.sshfl [vmem:[#allocation1 + $0x20] sm:$0xff pattern:$0x73625140]
    %274 = vst [vmem:[#allocation1] ss:$4 sm:$0xff] %v233
    %275 = vst [vmem:[%s258] ss:$4 sm:$0xff] %v234
    %276 = vst [vmem:[%s260] ss:$4 sm:$0xff] %v235
    %277 = vst [vmem:[%s262] ss:$4 sm:$0xff] %v236
    %278 = vst [vmem:[%s264] ss:$4 sm:$0xff] %v237
    %279 = vst [vmem:[%s266] ss:$4 sm:$0xff] %v238
    %280 = vst [vmem:[%s268] ss:$4 sm:$0xff] %v239
    %281 = vst [vmem:[%s270] ss:$4 sm:$0xff] %v240
    %v282 = vld.sshfl [vmem:[#allocation1] sm:$0xff pattern:$0x73625140]
    %v283 = vld.sshfl [vmem:[#allocation1 + $0x20] sm:$0xff pattern:$0x73625140]
    %vm288 = vcmask 261120
    %v289 = vsel %vm288, %v272, 0.0
    %290 = vadd.xlane.f32.xlu0 %v289
    %v291 = vpop.xlane.xlu0 %290
    %v292 = vsel %vm288, %v273, 0.0
    %293 = vadd.xlane.f32.xlu0 %v292
    %v294 = vpop.xlane.xlu0 %293
    %v295 = vsel %vm288, %v282, 0.0
    %296 = vadd.xlane.f32.xlu0 %v295
    %v297 = vpop.xlane.xlu0 %296
    %v298 = vsel %vm288, %v283, 0.0
    %299 = vadd.xlane.f32.xlu0 %v298
    %v300 = vpop.xlane.xlu0 %299
    %v301 = vrcp.pop 32.0
    %v302 = vmul.f32 32.0, %v301
    %v303 = vsub.f32 1.0, %v302
    %v304 = vmul.f32 %v301, %v303
    %v305 = vadd.f32 %v301, %v304
    %vm306 = vweird.f32 %v301
    %v307 = vsel %vm306, %v301, %v305
    %v308 = vmul.f32 %v291, %v307
    %v309 = vmul.f32 %v294, %v307
    %v310 = vmul.f32 %v297, %v307
    %v311 = vmul.f32 %v300, %v307
    %v312 = vmul.f32 %v225, %v225
    %v313 = vmul.f32 %v226, %v226
    %v314 = vmul.f32 %v227, %v227
    %v315 = vmul.f32 %v228, %v228
    %v316 = vmul.f32 %v229, %v229
    %v317 = vmul.f32 %v230, %v230
    %v318 = vmul.f32 %v231, %v231
    %v319 = vmul.f32 %v232, %v232
    %v320 = vmul.f32 %v233, %v233
    %v321 = vmul.f32 %v234, %v234
    %v322 = vmul.f32 %v235, %v235
    %v323 = vmul.f32 %v236, %v236
    %v324 = vmul.f32 %v237, %v237
    %v325 = vmul.f32 %v238, %v238
    %v326 = vmul.f32 %v239, %v239
    %v327 = vmul.f32 %v240, %v240
    %344 = vst [vmem:[#allocation1] ss:$4 sm:$0xff] %v312
    %s345 = scalar_lea.vmem [#allocation1], 1
    %346 = vst [vmem:[%s345] ss:$4 sm:$0xff] %v313
    %s347 = scalar_lea.vmem [#allocation1], 2
    %348 = vst [vmem:[%s347] ss:$4 sm:$0xff] %v314
    %s349 = scalar_lea.vmem [#allocation1], 3
    %350 = vst [vmem:[%s349] ss:$4 sm:$0xff] %v315
    %s351 = scalar_lea.vmem [#allocation1], 32
    %352 = vst [vmem:[%s351] ss:$4 sm:$0xff] %v316
    %s353 = scalar_lea.vmem [#allocation1], 33
    %354 = vst [vmem:[%s353] ss:$4 sm:$0xff] %v317
    %s355 = scalar_lea.vmem [#allocation1], 34
    %356 = vst [vmem:[%s355] ss:$4 sm:$0xff] %v318
    %s357 = scalar_lea.vmem [#allocation1], 35
    %358 = vst [vmem:[%s357] ss:$4 sm:$0xff] %v319
    %v359 = vld.sshfl [vmem:[#allocation1] sm:$0xff pattern:$0x73625140]
    %v360 = vld.sshfl [vmem:[#allocation1 + $0x20] sm:$0xff pattern:$0x73625140]
    %361 = vst [vmem:[#allocation1] ss:$4 sm:$0xff] %v320
    %362 = vst [vmem:[%s345] ss:$4 sm:$0xff] %v321
    %363 = vst [vmem:[%s347] ss:$4 sm:$0xff] %v322
    %364 = vst [vmem:[%s349] ss:$4 sm:$0xff] %v323
    %365 = vst [vmem:[%s351] ss:$4 sm:$0xff] %v324
    %366 = vst [vmem:[%s353] ss:$4 sm:$0xff] %v325
    %367 = vst [vmem:[%s355] ss:$4 sm:$0xff] %v326
    %368 = vst [vmem:[%s357] ss:$4 sm:$0xff] %v327
    %v369 = vld.sshfl [vmem:[#allocation1] sm:$0xff pattern:$0x73625140]
    %v370 = vld.sshfl [vmem:[#allocation1 + $0x20] sm:$0xff pattern:$0x73625140]
    %v375 = vsel %vm288, %v359, 0.0
    %376 = vadd.xlane.f32.xlu0 %v375
    %v377 = vpop.xlane.xlu0 %376
    %v378 = vsel %vm288, %v360, 0.0
    %379 = vadd.xlane.f32.xlu0 %v378
    %v380 = vpop.xlane.xlu0 %379
    %v381 = vsel %vm288, %v369, 0.0
    %382 = vadd.xlane.f32.xlu0 %v381
    %v383 = vpop.xlane.xlu0 %382
    %v384 = vsel %vm288, %v370, 0.0
    %385 = vadd.xlane.f32.xlu0 %v384
    %v386 = vpop.xlane.xlu0 %385
    %v387 = vmul.f32 %v377, %v307
    %v388 = vmul.f32 %v380, %v307
    %v389 = vmul.f32 %v383, %v307
    %v390 = vmul.f32 %v386, %v307
    %v391 = vmul.f32 %v308, %v308
    %v392 = vmul.f32 %v309, %v309
    %v393 = vmul.f32 %v310, %v310
    %v394 = vmul.f32 %v311, %v311
    %v395 = vsub.f32 %v387, %v391
    %v396 = vsub.f32 %v388, %v392
    %v397 = vsub.f32 %v389, %v393
    %v398 = vsub.f32 %v390, %v394
    %v399 = vmax.f32 %v395, 0.0
    %v400 = vmax.f32 %v396, 0.0
    %v401 = vmax.f32 %v397, 0.0
    %v402 = vmax.f32 %v398, 0.0
    %v408 = vunpack.c.l.s4 269488144
    %v409 = vunpack.c.0.s8 %v408
    %v410 = vperm.slane %v308, %v409
    %v412 = vunpack.c.l.s4 842150450
    %v413 = vunpack.c.0.s8 %v412
    %v414 = vperm.slane %v308, %v413
    %v416 = vunpack.c.l.s4 1414812756
    %v417 = vunpack.c.0.s8 %v416
    %v418 = vperm.slane %v308, %v417
    %v420 = vunpack.c.l.s4 1987475062
    %v421 = vunpack.c.0.s8 %v420
    %v422 = vperm.slane %v308, %v421
    %v424 = vunpack.c.l.s4 269488144
    %v425 = vunpack.c.0.s8 %v424
    %v426 = vperm.slane %v309, %v425
    %v428 = vunpack.c.l.s4 842150450
    %v429 = vunpack.c.0.s8 %v428
    %v430 = vperm.slane %v309, %v429
    %v432 = vunpack.c.l.s4 1414812756
    %v433 = vunpack.c.0.s8 %v432
    %v434 = vperm.slane %v309, %v433
    %v436 = vunpack.c.l.s4 1987475062
    %v437 = vunpack.c.0.s8 %v436
    %v438 = vperm.slane %v309, %v437
    %v440 = vunpack.c.l.s4 269488144
    %v441 = vunpack.c.0.s8 %v440
    %v442 = vperm.slane %v310, %v441
    %v444 = vunpack.c.l.s4 842150450
    %v445 = vunpack.c.0.s8 %v444
    %v446 = vperm.slane %v310, %v445
    %v448 = vunpack.c.l.s4 1414812756
    %v449 = vunpack.c.0.s8 %v448
    %v450 = vperm.slane %v310, %v449
    %v452 = vunpack.c.l.s4 1987475062
    %v453 = vunpack.c.0.s8 %v452
    %v454 = vperm.slane %v310, %v453
    %v456 = vunpack.c.l.s4 269488144
    %v457 = vunpack.c.0.s8 %v456
    %v458 = vperm.slane %v311, %v457
    %v460 = vunpack.c.l.s4 842150450
    %v461 = vunpack.c.0.s8 %v460
    %v462 = vperm.slane %v311, %v461
    %v464 = vunpack.c.l.s4 1414812756
    %v465 = vunpack.c.0.s8 %v464
    %v466 = vperm.slane %v311, %v465
    %v468 = vunpack.c.l.s4 1987475062
    %v469 = vunpack.c.0.s8 %v468
    %v470 = vperm.slane %v311, %v469
    %v487 = vsub.f32 %v225, %v410
    %v488 = vsub.f32 %v226, %v414
    %v489 = vsub.f32 %v227, %v418
    %v490 = vsub.f32 %v228, %v422
    %v491 = vsub.f32 %v229, %v426
    %v492 = vsub.f32 %v230, %v430
    %v493 = vsub.f32 %v231, %v434
    %v494 = vsub.f32 %v232, %v438
    %v495 = vsub.f32 %v233, %v442
    %v496 = vsub.f32 %v234, %v446
    %v497 = vsub.f32 %v235, %v450
    %v498 = vsub.f32 %v236, %v454
    %v499 = vsub.f32 %v237, %v458
    %v500 = vsub.f32 %v238, %v462
    %v501 = vsub.f32 %v239, %v466
    %v502 = vsub.f32 %v240, %v470
    %v503 = vadd.f32 %v399, 1e-05
    %v504 = vadd.f32 %v400, 1e-05
    %v505 = vadd.f32 %v401, 1e-05
    %v506 = vadd.f32 %v402, 1e-05
    %v507 = vrsqrt.pop %v503
    %v508 = vmul.f32 %v507, %v503
    %v509 = vmul.f32 %v508, %v507
    %v510 = vmul.f32 0.5, %v509
    %v511 = vsub.f32 1.5, %v510
    %v512 = vmul.f32 %v507, %v511
    %vm513 = vweird.f32 %v503
    %vm514 = vweird.f32 %v507
    %vm515 = vmor %vm513, %vm514
    %v516 = vsel %vm515, %v507, %v512
    %v517 = vrsqrt.pop %v504
    %v518 = vmul.f32 %v517, %v504
    %v519 = vmul.f32 %v518, %v517
    %v520 = vmul.f32 0.5, %v519
    %v521 = vsub.f32 1.5, %v520
    %v522 = vmul.f32 %v517, %v521
    %vm523 = vweird.f32 %v504
    %vm524 = vweird.f32 %v517
    %vm525 = vmor %vm523, %vm524
    %v526 = vsel %vm525, %v517, %v522
    %v527 = vrsqrt.pop %v505
    %v528 = vmul.f32 %v527, %v505
    %v529 = vmul.f32 %v528, %v527
    %v530 = vmul.f32 0.5, %v529
    %v531 = vsub.f32 1.5, %v530
    %v532 = vmul.f32 %v527, %v531
    %vm533 = vweird.f32 %v505
    %vm534 = vweird.f32 %v527
    %vm535 = vmor %vm533, %vm534
    %v536 = vsel %vm535, %v527, %v532
    %v537 = vrsqrt.pop %v506
    %v538 = vmul.f32 %v537, %v506
    %v539 = vmul.f32 %v538, %v537
    %v540 = vmul.f32 0.5, %v539
    %v541 = vsub.f32 1.5, %v540
    %v542 = vmul.f32 %v537, %v541
    %vm543 = vweird.f32 %v506
    %vm544 = vweird.f32 %v537
    %vm545 = vmor %vm543, %vm544
    %v546 = vsel %vm545, %v537, %v542
    %v552 = vunpack.c.l.s4 269488144
    %v553 = vunpack.c.0.s8 %v552
    %v554 = vperm.slane %v516, %v553
    %v556 = vunpack.c.l.s4 842150450
    %v557 = vunpack.c.0.s8 %v556
    %v558 = vperm.slane %v516, %v557
    %v560 = vunpack.c.l.s4 1414812756
    %v561 = vunpack.c.0.s8 %v560
    %v562 = vperm.slane %v516, %v561
    %v564 = vunpack.c.l.s4 1987475062
    %v565 = vunpack.c.0.s8 %v564
    %v566 = vperm.slane %v516, %v565
    %v568 = vunpack.c.l.s4 269488144
    %v569 = vunpack.c.0.s8 %v568
    %v570 = vperm.slane %v526, %v569
    %v572 = vunpack.c.l.s4 842150450
    %v573 = vunpack.c.0.s8 %v572
    %v574 = vperm.slane %v526, %v573
    %v576 = vunpack.c.l.s4 1414812756
    %v577 = vunpack.c.0.s8 %v576
    %v578 = vperm.slane %v526, %v577
    %v580 = vunpack.c.l.s4 1987475062
    %v581 = vunpack.c.0.s8 %v580
    %v582 = vperm.slane %v526, %v581
    %v584 = vunpack.c.l.s4 269488144
    %v585 = vunpack.c.0.s8 %v584
    %v586 = vperm.slane %v536, %v585
    %v588 = vunpack.c.l.s4 842150450
    %v589 = vunpack.c.0.s8 %v588
    %v590 = vperm.slane %v536, %v589
    %v592 = vunpack.c.l.s4 1414812756
    %v593 = vunpack.c.0.s8 %v592
    %v594 = vperm.slane %v536, %v593
    %v596 = vunpack.c.l.s4 1987475062
    %v597 = vunpack.c.0.s8 %v596
    %v598 = vperm.slane %v536, %v597
    %v600 = vunpack.c.l.s4 269488144
    %v601 = vunpack.c.0.s8 %v600
    %v602 = vperm.slane %v546, %v601
    %v604 = vunpack.c.l.s4 842150450
    %v605 = vunpack.c.0.s8 %v604
    %v606 = vperm.slane %v546, %v605
    %v608 = vunpack.c.l.s4 1414812756
    %v609 = vunpack.c.0.s8 %v608
    %v610 = vperm.slane %v546, %v609
    %v612 = vunpack.c.l.s4 1987475062
    %v613 = vunpack.c.0.s8 %v612
    %v614 = vperm.slane %v546, %v613
    %v631 = vmul.f32 %v487, %v554
    %v632 = vmul.f32 %v488, %v558
    %v633 = vmul.f32 %v489, %v562
    %v634 = vmul.f32 %v490, %v566
    %v635 = vmul.f32 %v491, %v570
    %v636 = vmul.f32 %v492, %v574
    %v637 = vmul.f32 %v493, %v578
    %v638 = vmul.f32 %v494, %v582
    %v639 = vmul.f32 %v495, %v586
    %v640 = vmul.f32 %v496, %v590
    %v641 = vmul.f32 %v497, %v594
    %v642 = vmul.f32 %v498, %v598
    %v643 = vmul.f32 %v499, %v602
    %v644 = vmul.f32 %v500, %v606
    %v645 = vmul.f32 %v501, %v610
    %v646 = vmul.f32 %v502, %v614
    %663 = vst [vmem:[#allocation1] ss:$4 sm:$0xff] %v631
    %s664 = scalar_lea.vmem [#allocation1], 1
    %665 = vst [vmem:[%s664] ss:$4 sm:$0xff] %v632
    %s666 = scalar_lea.vmem [#allocation1], 2
    %667 = vst [vmem:[%s666] ss:$4 sm:$0xff] %v633
    %s668 = scalar_lea.vmem [#allocation1], 3
    %669 = vst [vmem:[%s668] ss:$4 sm:$0xff] %v634
    %s670 = scalar_lea.vmem [#allocation1], 32
    %671 = vst [vmem:[%s670] ss:$4 sm:$0xff] %v635
    %s672 = scalar_lea.vmem [#allocation1], 33
    %673 = vst [vmem:[%s672] ss:$4 sm:$0xff] %v636
    %s674 = scalar_lea.vmem [#allocation1], 34
    %675 = vst [vmem:[%s674] ss:$4 sm:$0xff] %v637
    %s676 = scalar_lea.vmem [#allocation1], 35
    %677 = vst [vmem:[%s676] ss:$4 sm:$0xff] %v638
    %v678 = vld.sshfl [vmem:[#allocation1] sm:$0xff pattern:$0x73625140]
    %v679 = vld.sshfl [vmem:[#allocation1 + $0x20] sm:$0xff pattern:$0x73625140]
    %680 = vst [vmem:[#allocation1] ss:$4 sm:$0xff] %v639
    %681 = vst [vmem:[%s664] ss:$4 sm:$0xff] %v640
    %682 = vst [vmem:[%s666] ss:$4 sm:$0xff] %v641
    %683 = vst [vmem:[%s668] ss:$4 sm:$0xff] %v642
    %684 = vst [vmem:[%s670] ss:$4 sm:$0xff] %v643
    %685 = vst [vmem:[%s672] ss:$4 sm:$0xff] %v644
    %686 = vst [vmem:[%s674] ss:$4 sm:$0xff] %v645
    %687 = vst [vmem:[%s676] ss:$4 sm:$0xff] %v646
    %v688 = vld.sshfl [vmem:[#allocation1] sm:$0xff pattern:$0x73625140]
    %v689 = vld.sshfl [vmem:[#allocation1 + $0x20] sm:$0xff pattern:$0x73625140]
    %v694 = vpack.c.bf16 %v679, %v678
    %v695 = vpack.c.bf16 %v689, %v688
    %v696 = vld [vmem:[%s154] sm:$0xf]
    %v697 = vld [vmem:[%s154 + $0x4] sm:$0xf]
    %v698 = vld [vmem:[%s154 + $0x8] sm:$0xf]
    %v699 = vld [vmem:[%s154 + $0xc] sm:$0xf]
    %v700 = vld [vmem:[%s159] sm:$0x1]
    %v701 = vunpack.c.l.bf16 %v700
    %v702 = vperm.slane %v701, 0
    %v707 = vunpack.c.l.b16 %v696
    %v708 = vunpack.c.l.b16 %v697
    %v709 = vunpack.c.l.b16 %v698
    %v710 = vunpack.c.l.b16 %v699
    %v711 = vpack.c.b16 %v708, %v707
    %v712 = vpack.c.b16 %v710, %v709
    %v716 = vsel %vm288, %v694, 0
    %v719 = vsel %vm288, %v695, 0
    %721 = vmatpush.bf16.msra.mxu0 0
    %722 = vmatpush.bf16.msra.mxu0 0
    %723 = vmatpush.bf16.msra.mxu0 0
    %724 = vmatpush.bf16.msra.mxu0 0
    %725 = vmatpush.bf16.msra.mxu0 0
    %726 = vmatpush.bf16.msra.mxu0 0
    %727 = vmatpush.bf16.msra.mxu0 %v712
    %728 = vmatpush.bf16.msra.mxu0 %v711
    %729 = vmatmul.bf16.gmra.mxu0 %v716
    %v730 = vpop.f32.mrf.mxu0
    %v731 = vadd.f32 %v702, %v730
    %v732 = vpop.f32.mrf.mxu0
    %v733 = vadd.f32 %v702, %v732
    %734 = vmatmul.bf16.gmra.mxu0 %v719
    %v735 = vpop.f32.mrf.mxu0
    %v736 = vadd.f32 %v702, %v735
    %v737 = vpop.f32.mrf.mxu0
    %v738 = vadd.f32 %v702, %v737
    %739 = vdwg.mxu0
    %v740 = vtanh.pop %v731
    %v741 = vtanh.pop %v733
    %v742 = vtanh.pop %v736
    %v743 = vtanh.pop %v738
    %v744 = vpack.c.bf16 %v741, %v740
    %v745 = vpack.c.bf16 %v743, %v742
    %v746 = vld [vmem:[%s166] sm:$0xf]
    %v747 = vld [vmem:[%s166 + $0x4] sm:$0xf]
    %v748 = vld [vmem:[%s171] sm:$0x1]
    %v749 = vunpack.c.l.bf16 %v748
    %v750 = vperm.slane %v749, 0
    %v753 = vunpack.c.l.b16 %v746
    %v754 = vunpack.c.l.b16 %v747
    %v755 = vpack.c.b16 %v754, %v753
    %vm757 = vcmask 130048
    %v759 = vsel %vm757, %v744, 0
    %v762 = vsel %vm757, %v745, 0
    %764 = vmatpush.bf16.msra.mxu0 0
    %765 = vmatpush.bf16.msra.mxu0 0
    %766 = vmatpush.bf16.msra.mxu0 0
    %767 = vmatpush.bf16.msra.mxu0 0
    %768 = vmatpush.bf16.msra.mxu0 0
    %769 = vmatpush.bf16.msra.mxu0 0
    %770 = vmatpush.bf16.msra.mxu0 0
    %771 = vmatpush.bf16.msra.mxu0 %v755
    %772 = vmatmul.bf16.gmra.mxu0 %v759
    %v773 = vpop.f32.mrf.mxu0
    %v774 = vadd.f32 %v750, %v773
    %v775 = vpop.f32.mrf.mxu0
    %v776 = vadd.f32 %v750, %v775
    %777 = vmatmul.bf16.gmra.mxu0 %v762
    %v778 = vpop.f32.mrf.mxu0
    %v779 = vadd.f32 %v750, %v778
    %v780 = vpop.f32.mrf.mxu0
    %v781 = vadd.f32 %v750, %v780
    %782 = vdwg.mxu0
    %v783 = vtanh.pop %v774
    %v784 = vtanh.pop %v776
    %v785 = vtanh.pop %v779
    %v786 = vtanh.pop %v781
    %v787 = vpack.c.bf16 %v784, %v783
    %v788 = vpack.c.bf16 %v786, %v785
    %v789 = vld [vmem:[%s178] sm:$0xf]
    %v790 = vld [vmem:[%s178 + $0x4] sm:$0xf]
    %v791 = vld [vmem:[%s183] sm:$0x1]
    %v792 = vunpack.c.l.bf16 %v791
    %v793 = vperm.slane %v792, 0
    %v796 = vunpack.c.l.b16 %v789
    %v797 = vunpack.c.l.b16 %v790
    %v798 = vpack.c.b16 %v797, %v796
    %v801 = vsel %vm757, %v787, 0
    %v804 = vsel %vm757, %v788, 0
    %806 = vmatpush.bf16.msra.mxu0 0
    %807 = vmatpush.bf16.msra.mxu0 0
    %808 = vmatpush.bf16.msra.mxu0 0
    %809 = vmatpush.bf16.msra.mxu0 0
    %810 = vmatpush.bf16.msra.mxu0 0
    %811 = vmatpush.bf16.msra.mxu0 0
    %812 = vmatpush.bf16.msra.mxu0 0
    %813 = vmatpush.bf16.msra.mxu0 %v798
    %814 = vmatmul.bf16.gmra.mxu0 %v801
    %v815 = vpop.f32.mrf.mxu0
    %v816 = vadd.f32 %v793, %v815
    %v817 = vpop.f32.mrf.mxu0
    %v818 = vadd.f32 %v793, %v817
    %819 = vmatmul.bf16.gmra.mxu0 %v804
    %v820 = vpop.f32.mrf.mxu0
    %v821 = vadd.f32 %v793, %v820
    %v822 = vpop.f32.mrf.mxu0
    %v823 = vadd.f32 %v793, %v822
    %824 = vdwg.mxu0
    %v825 = vtanh.pop %v816
    %v826 = vtanh.pop %v818
    %v827 = vtanh.pop %v821
    %v828 = vtanh.pop %v823
    %v829 = vpack.c.bf16 %v826, %v825
    %v830 = vpack.c.bf16 %v828, %v827
    %v831 = vld [vmem:[%s190] sm:$0xf]
    %v832 = vld [vmem:[%s190 + $0x4] sm:$0xf]
    %v833 = vld [vmem:[%s195] sm:$0x1]
    %v834 = vunpack.c.l.bf16 %v833
    %v835 = vperm.slane %v834, 0
    %v838 = vunpack.c.l.b16 %v831
    %v839 = vunpack.c.l.b16 %v832
    %v840 = vpack.c.b16 %v839, %v838
    %v843 = vsel %vm757, %v829, 0
    %v846 = vsel %vm757, %v830, 0
    %848 = vmatpush.bf16.msra.mxu0 0
    %849 = vmatpush.bf16.msra.mxu0 0
    %850 = vmatpush.bf16.msra.mxu0 0
    %851 = vmatpush.bf16.msra.mxu0 0
    %852 = vmatpush.bf16.msra.mxu0 0
    %853 = vmatpush.bf16.msra.mxu0 0
    %854 = vmatpush.bf16.msra.mxu0 0
    %855 = vmatpush.bf16.msra.mxu0 %v840
    %856 = vmatmul.bf16.gmra.mxu0 %v843
    %v857 = vpop.f32.mrf.mxu0
    %v858 = vadd.f32 %v835, %v857
    %v859 = vpop.f32.mrf.mxu0
    %v860 = vadd.f32 %v835, %v859
    %861 = vmatmul.bf16.gmra.mxu0 %v846
    %v862 = vpop.f32.mrf.mxu0
    %v863 = vadd.f32 %v835, %v862
    %v864 = vpop.f32.mrf.mxu0
    %v865 = vadd.f32 %v835, %v864
    %866 = vdwg.mxu0
    %v867 = vtanh.pop %v858
    %v868 = vtanh.pop %v860
    %v869 = vtanh.pop %v863
    %v870 = vtanh.pop %v865
    %v871 = vpack.c.bf16 %v868, %v867
    %v872 = vpack.c.bf16 %v870, %v869
    %v873 = vld [vmem:[%s201] sm:$0xf]
    %v874 = vld [vmem:[%s206] sm:$0x1]
    %v875 = vunpack.c.l.bf16 %v874
    %v876 = vperm.slane %v875, 0
    %vm877 = vcmask 64512
    %v879 = vsel %vm877, %v871, 0
    %v882 = vsel %vm877, %v872, 0
    %vm884 = vcmask 1043456
    %v886 = vsel %vm884, %v873, 0
    %888 = vmatpush.bf16.msra.mxu0 0
    %889 = vmatpush.bf16.msra.mxu0 0
    %890 = vmatpush.bf16.msra.mxu0 0
    %891 = vmatpush.bf16.msra.mxu0 0
    %892 = vmatpush.bf16.msra.mxu0 0
    %893 = vmatpush.bf16.msra.mxu0 0
    %894 = vmatpush.bf16.msra.mxu0 0
    %895 = vmatpush.bf16.msra.mxu0 %v886
    %896 = vmatmul.bf16.gmra.mxu0 %v879
    %v897 = vpop.f32.mrf.mxu0
    %v898 = vadd.f32 %v876, %v897
    %v899 = vpop.f32.mrf.mxu0
    %v900 = vadd.f32 %v876, %v899
    %901 = vmatmul.bf16.gmra.mxu0 %v882
    %v902 = vpop.f32.mrf.mxu0
    %v903 = vadd.f32 %v876, %v902
    %v904 = vpop.f32.mrf.mxu0
    %v905 = vadd.f32 %v876, %v904
    %906 = vdwg.mxu0
    %vm907 = vcmask 31744
    %908 = vst.msk [vmem:[#allocation4] sm:$0xff] %vm907, %v898
    %909 = vst.msk [vmem:[#allocation4 + $0x8] sm:$0xff] %vm907, %v900
    %910 = vst.msk [vmem:[#allocation4 + $0x10] sm:$0xff] %vm907, %v903
    %911 = vst.msk [vmem:[#allocation4 + $0x18] sm:$0xff] %vm907, %v905
    // Predicated region
    $region46: #{forward.1} parent=1 // pred_check
      _
    $region47: #{forward.1} parent=1 // pred_check_branch
      %913 = sbr.rel (0) target = $region49
    $region48: #{forward.1} parent=1 // pred_region
      %915 = vsyncadd [#allocation5], 480
      %s916 = sshll.u32 [#allocation4], 4
      %s917 = int_to_ptr.vmem [resolvable:$true] %s916
      %s918 = sshll.u32 %s12, 4
      %s919 = int_to_ptr.hbm [resolvable:$true] %s918
      %924 = dma.vmem_to_hbm [thread:$0]  %s917, 32, %s919, [#allocation5], 32, 32, 2
    $region49: #{forward.1} parent=1 // pred_fallthru
      _
    // Predicated region
    $region50: #{forward.1} parent=1 // pred_check
      _
    $region51: #{forward.1} parent=1 // pred_check_branch
      %926 = sbr.rel (0) target = $region53
    $region52: #{forward.1} parent=1 // pred_region
      %928 = dma.done [#allocation5], 512
    $region53: #{forward.1} parent=1 // pred_fallthru
      _
    %929 = vsyncpa [#allocation5], 1

</llo_original>
